<compile_context>
chip_gen: v5e
topology: v5e:2x2
jax: 0.10.0
libtpu: 0.0.40
codegen_flags: <defaults>
</compile_context>

<pallas_src>
import jax
import jax.numpy as jnp
from jax.experimental import pallas as pl
from jax.experimental.pallas import tpu as pltpu


def _round_up(x, m):
    return (x + m - 1) // m * m


def _cdiv(a, b):
    return (a + b - 1) // b


def _vmem_capacity_bytes():
    try:
        return int(pltpu.get_tpu_info().vmem_capacity_bytes)
    except Exception:
        return 64 * 1024 * 1024  # conservative fallback: v7x has 64 MiB / TC


def _pick_tile(dim, candidates=(512, 384, 256, 128)):
    """Pick the tile (multiple of 128) that minimizes padding of `dim`."""
    best_t, best_pad = candidates[0], _round_up(dim, candidates[0])
    for t in candidates[1:]:
        p = _round_up(dim, t)
        if p < best_pad:
            best_t, best_pad = t, p
    return best_t, best_pad


# --------------------- Path A: resident-weight kernel -----------------------

def _kernel_resident(x_ref, w_ref, b_ref, o_ref):
    # x_ref: (TM, F), w_ref: (F, Hp) resident, b_ref: (1, Hp), o_ref: (TM, Hp)
    acc = jnp.dot(x_ref[...], w_ref[...], preferred_element_type=jnp.float32)
    o_ref[...] = (acc + b_ref[...]).astype(o_ref.dtype)


# --------------------- Path B: (M, N, K)-tiled kernel -----------------------

def _kernel_tiled(x_ref, w_ref, b_ref, o_ref, acc_ref):
    @pl.when(pl.program_id(2) == 0)
    def _():
        acc_ref[...] = jnp.zeros_like(acc_ref)

    acc_ref[...] += jnp.dot(
        x_ref[...], w_ref[...], preferred_element_type=jnp.float32
    )

    @pl.when(pl.program_id(2) == pl.num_programs(2) - 1)
    def _():
        o_ref[...] = (acc_ref[...] + b_ref[...]).astype(o_ref.dtype)


def _linear_pallas(x2d, w, b, *, out_dtype=None, tm_max=1024, force_tiled=False):
    """x2d: (M, F), w: (F, H), b: (H,) -> (M, H) via y = x @ w + b."""
    M, F = x2d.shape
    H = w.shape[1]
    out_dtype = jnp.dtype(out_dtype or x2d.dtype)
    x_isz = jnp.dtype(x2d.dtype).itemsize
    w_isz = jnp.dtype(w.dtype).itemsize
    o_isz = out_dtype.itemsize

    cap = _vmem_capacity_bytes()
    budget = int(cap * 0.75)

    b32 = b.astype(jnp.float32)
    H_pad = _round_up(H, 128)

    # Can the (single-buffered) weight stay resident next to a sane row tile?
    tm_floor = min(256, _round_up(M, 8))
    resident_fixed = F * H_pad * w_isz + H_pad * 4
    resident_need = resident_fixed + 2 * tm_floor * (F * x_isz + H_pad * o_isz)
    use_tiled = force_tiled or (resident_need > budget)

    if not use_tiled:
        # --------------------- resident-weight path -------------------------
        w_p = jnp.pad(w, ((0, 0), (0, H_pad - H))) if H_pad != H else w
        b_p = (jnp.pad(b32, (0, H_pad - H)) if H_pad != H else b32).reshape(1, H_pad)

        tm = min(tm_max, _round_up(M, 8))
        if M >= 512:
            # >= 2 M tiles so the "parallel" axis can feed both v7x TCs.
            tm = min(tm, _round_up(_cdiv(M, 2), 256))
        while tm > 8:
            need = resident_fixed + 2 * tm * (F * x_isz + H_pad * o_isz)
            if need <= budget:
                break
            tm //= 2
        tm = max(_round_up(tm, 8), 8)

        grid = (_cdiv(M, tm),)
        need = resident_fixed + 2 * tm * (F * x_isz + H_pad * o_isz)
        vmem_limit = int(min(max(need + (8 << 20), 32 << 20), int(cap * 0.9)))

        cost = pl.CostEstimate(
            flops=2 * M * F * H_pad,
            transcendentals=0,
            bytes_accessed=(M * F * x_isz + F * H_pad * w_isz + H_pad * 4
                            + M * H_pad * o_isz),
        )

        y_p = pl.pallas_call(
            _kernel_resident,
            out_shape=jax.ShapeDtypeStruct((M, H_pad), out_dtype),
            grid_spec=pltpu.PrefetchScalarGridSpec(
                num_scalar_prefetch=0,
                grid=grid,
                in_specs=[
                    # streamed activation tile (double-buffered by default)
                    pl.BlockSpec((tm, F), lambda i: (i, 0)),
                    # constant index maps -> fetched once; single-buffered to
                    # free VMEM for larger row tiles.
                    pl.BlockSpec((F, H_pad), lambda i: (0, 0),
                                 pipeline_mode=pl.Buffered(1)),
                    pl.BlockSpec((1, H_pad), lambda i: (0, 0),
                                 pipeline_mode=pl.Buffered(1)),
                ],
                out_specs=pl.BlockSpec((tm, H_pad), lambda i: (i, 0)),
            ),
            compiler_params=pltpu.CompilerParams(
                dimension_semantics=("parallel",),
                vmem_limit_bytes=vmem_limit,
            ),
            cost_estimate=cost,
        )(x2d, w_p, b_p)
    else:
        # --------------------- (M, N, K)-tiled fallback ----------------------
        tn, H_pad = _pick_tile(H)
        tk, F_pad = _pick_tile(F)

        tm = min(512, _round_up(M, 8))
        while tm > 8:
            need = (2 * tm * tk * x_isz + 2 * tk * tn * w_isz + 2 * tn * 4
                    + 2 * tm * tn * o_isz + tm * tn * 4)
            if need <= budget:
                break
            tm //= 2
        tm = max(_round_up(tm, 8), 8)

        # K padding must be exact zeros (it feeds the contraction).
        x_p = jnp.pad(x2d, ((0, 0), (0, F_pad - F))) if F_pad != F else x2d
        w_p = w
        if (F_pad, H_pad) != (F, H):
            w_p = jnp.pad(w, ((0, F_pad - F), (0, H_pad - H)))
        b_p = (jnp.pad(b32, (0, H_pad - H)) if H_pad != H else b32).reshape(1, H_pad)

        grid = (_cdiv(M, tm), H_pad // tn, F_pad // tk)
        need = (2 * tm * tk * x_isz + 2 * tk * tn * w_isz + 2 * tn * 4
                + 2 * tm * tn * o_isz + tm * tn * 4)
        vmem_limit = int(min(max(need + (8 << 20), 32 << 20), int(cap * 0.9)))

        cost = pl.CostEstimate(
            flops=2 * M * F_pad * H_pad,
            transcendentals=0,
            bytes_accessed=(M * F_pad * x_isz * (H_pad // tn)
                            + F_pad * H_pad * w_isz * _cdiv(M, tm)
                            + M * H_pad * o_isz),
        )

        y_p = pl.pallas_call(
            _kernel_tiled,
            out_shape=jax.ShapeDtypeStruct((M, H_pad), out_dtype),
            grid_spec=pltpu.PrefetchScalarGridSpec(
                num_scalar_prefetch=0,
                grid=grid,
                in_specs=[
                    pl.BlockSpec((tm, tk), lambda i, j, k: (i, k)),
                    pl.BlockSpec((tk, tn), lambda i, j, k: (k, j)),
                    pl.BlockSpec((1, tn), lambda i, j, k: (0, j)),
                ],
                out_specs=pl.BlockSpec((tm, tn), lambda i, j, k: (i, j)),
                scratch_shapes=[pltpu.VMEM((tm, tn), jnp.float32)],
            ),
            compiler_params=pltpu.CompilerParams(
                dimension_semantics=("parallel", "parallel", "arbitrary"),
                vmem_limit_bytes=vmem_limit,
            ),
            cost_estimate=cost,
        )(x_p, w_p, b_p)

    if y_p.shape[1] != H:
        y_p = y_p[:, :H]
    return y_p


def time_distributed_linear(x, w, b, *, compute_dtype=None, out_dtype=None,
                            force_tiled=False):
    """Reproduces TimeDistributed(nn.Linear).forward semantics.

    rank <= 2 : apply the linear directly (torch: return self.module(x)).
    rank >= 3 : collapse leading dims, apply the linear over the last dim,
                restore leading dims (identical to torch's reshape dance when
                the inner module is Linear).
    compute_dtype=jnp.bfloat16 enables the reduced-precision HBM/MXU path.
    """
    # TODO(synk): non-Linear inner modules (e.g. Conv for rank-4/5 feature
    # maps) are not implemented; only the Linear inner module is supported.
    out_dtype = out_dtype or x.dtype
    if compute_dtype is not None:
        x = x.astype(compute_dtype)
        w = w.astype(compute_dtype)

    F = x.shape[-1]
    lead = x.shape[:-1]
    x2d = x if x.ndim == 2 else x.reshape(-1, F)
    y2d = _linear_pallas(x2d, w, b, out_dtype=out_dtype, force_tiled=force_tiled)
    H = y2d.shape[-1]
    if x.ndim == 2:
        return y2d
    if x.ndim == 1:
        return y2d.reshape(H)
    return y2d.reshape(*lead, H)


if __name__ == "__main__":
    key = jax.random.PRNGKey(0)
    kx, kw, kb = jax.random.split(key, 3)

    B, T, F, H = 2, 8, 32, 32          # batch, time, in_features, out_features

    x = jax.random.normal(kx, (B, T, F), dtype=jnp.float32)
    bound = 1.0 / jnp.sqrt(jnp.float32(F))
    w = jax.random.uniform(kw, (F, H), minval=-bound, maxval=bound,
                           dtype=jnp.float32)
    b = jax.random.uniform(kb, (H,), minval=-bound, maxval=bound,
                           dtype=jnp.float32)

    # Rank-3: the canonical TimeDistributed path (resident-weight kernel).
    y = time_distributed_linear(x, w, b)
    jax.block_until_ready(y)
    y_ref = (x.reshape(-1, F) @ w + b).reshape(B, T, H)
    assert y.shape == (B, T, H)
    assert jnp.allclose(y, y_ref, atol=1e-5, rtol=1e-5)

    # Rank-2 path (torch: module(x) directly), ragged M = 5 rows.
    x2 = jax.random.normal(kx, (5, F), dtype=jnp.float32)
    y2 = time_distributed_linear(x2, w, b)
    jax.block_until_ready(y2)
    assert jnp.allclose(y2, x2 @ w + b, atol=1e-5, rtol=1e-5)

    # (M, N, K)-tiled fallback (auto-selected for large weights); exercised
    # here explicitly at a small ragged-M / multi-tile shape.
    M2, F2, H2 = 197, 640, 640
    xb = jax.random.normal(kx, (M2, F2), dtype=jnp.float32)
    wb = jax.random.normal(kw, (F2, H2), dtype=jnp.float32) * 0.05
    bb = jax.random.normal(kb, (H2,), dtype=jnp.float32)
    yb = time_distributed_linear(xb, wb, bb, force_tiled=True)
    jax.block_until_ready(yb)
    yb_ref = jnp.dot(xb, wb, precision=jax.lax.Precision.HIGHEST) + bb
    assert jnp.allclose(yb, yb_ref, atol=5e-3, rtol=5e-3)

    # Optional bf16 compute path (halves HBM traffic; looser numerics).
    ybf = time_distributed_linear(x, w, b, compute_dtype=jnp.bfloat16)
    jax.block_until_ready(ybf)
    assert ybf.shape == (B, T, H)
    assert jnp.allclose(ybf.astype(jnp.float32), y_ref, atol=5e-2, rtol=5e-2)

    print("KERNEL_OK")
</pallas_src>

<mosaic_0001>
module attributes {stable_mosaic.version = 11 : i64} {
  func.func @_kernel_resident(%arg0: i32, %arg1: memref<16x32xf32, #tpu.memory_space<vmem>>, %arg2: memref<32x128xf32, #tpu.memory_space<vmem>>, %arg3: memref<1x128xf32, #tpu.memory_space<vmem>>, %arg4: memref<16x128xf32, #tpu.memory_space<vmem>>) attributes {dimension_semantics = [#tpu.dimension_semantics<parallel>], iteration_bounds = array<i64: 1>, scalar_prefetch = 0 : i64, scratch_operands = 0 : i64, tpu.core_type = #tpu.core_type<tc>, window_params = [{transform_indices = @transform_0, window_bounds = array<i64: 16, 32>}, {pipeline_mode = #tpu.pipeline_mode<synchronous>, transform_indices = @transform_1, window_bounds = array<i64: 32, 128>}, {pipeline_mode = #tpu.pipeline_mode<synchronous>, transform_indices = @transform_2, window_bounds = array<i64: 1, 128>}, {transform_indices = @transform_3, window_bounds = array<i64: 16, 128>}]} {
    %c0 = arith.constant 0 : index
    %c0_0 = arith.constant 0 : index
    %0 = vector.load %arg1[%c0, %c0_0] : memref<16x32xf32, #tpu.memory_space<vmem>>, vector<16x32xf32>
    %c0_1 = arith.constant 0 : index
    %c0_2 = arith.constant 0 : index
    %1 = vector.load %arg2[%c0_1, %c0_2] : memref<32x128xf32, #tpu.memory_space<vmem>>, vector<32x128xf32>
    %cst = arith.constant dense<0.000000e+00> : vector<16x128xf32>
    %2 = tpu.matmul %0, %1, %cst {dimension_numbers = #tpu.dot_dimension_numbers<[1], [0], [0], [1], [0, 0, 1, 1], [], []>} : vector<16x32xf32>, vector<32x128xf32>, vector<16x128xf32> -> vector<16x128xf32>
    %c0_3 = arith.constant 0 : index
    %c0_4 = arith.constant 0 : index
    %3 = vector.load %arg3[%c0_3, %c0_4] : memref<1x128xf32, #tpu.memory_space<vmem>>, vector<1x128xf32>
    %4 = vector.broadcast %3 : vector<1x128xf32> to vector<16x128xf32>
    %5 = arith.addf %2, %4 : vector<16x128xf32>
    %c0_5 = arith.constant 0 : index
    %c0_6 = arith.constant 0 : index
    %6 = vector.load %arg4[%c0_5, %c0_6] : memref<16x128xf32, #tpu.memory_space<vmem>>, vector<16x128xf32>
    tpu.vector_store %arg4[%c0_5, %c0_6], %5 {strides = array<i32>} : memref<16x128xf32, #tpu.memory_space<vmem>>, vector<16x128xf32>,
    return
  }
  func.func @transform_0(%arg0: i32) -> (i32, i32) {
    %c0_i32 = arith.constant 0 : i32
    %c0_i32_0 = arith.constant 0 : i32
    return %arg0, %c0_i32 : i32, i32
  }
  func.func @transform_1(%arg0: i32) -> (i32, i32) {
    %c0_i32 = arith.constant 0 : i32
    %c0_i32_0 = arith.constant 0 : i32
    %c0_i32_1 = arith.constant 0 : i32
    return %c0_i32, %c0_i32_0 : i32, i32
  }
  func.func @transform_2(%arg0: i32) -> (i32, i32) {
    %c0_i32 = arith.constant 0 : i32
    %c0_i32_0 = arith.constant 0 : i32
    %c0_i32_1 = arith.constant 0 : i32
    return %c0_i32, %c0_i32_0 : i32, i32
  }
  func.func @transform_3(%arg0: i32) -> (i32, i32) {
    %c0_i32 = arith.constant 0 : i32
    %c0_i32_0 = arith.constant 0 : i32
    return %arg0, %c0_i32 : i32, i32
  }
}

</mosaic_0001>

<llo_original>
// kernel: tpu_custom_call.1
$region0: #{tpu_custom_call.1}
  #allocation0 [shape = 'u32[]', space=smem, size = 0x4, offset = 0x4, fixed_abs, tag = 'smem constant byte address 0x4 - core index']
  #allocation1 [shape = 'u32[72,128]{1,0:T(1,128)}', space=vmem, size = 0x9000, scoped, tag = 'internal scratch']
  %s0 = inlined_call_operand.hbm [shape: f32[16,32], index: 0, kind: input, shape index: {}]
  %s1 = inlined_call_operand.hbm [shape: f32[32,128], index: 1, kind: input, shape index: {}]
  %s2 = inlined_call_operand.vmem [shape: f32[1,128], index: 2, kind: input, shape index: {}]
  %s3 = inlined_call_operand.hbm [shape: f32[16,128], index: 3, kind: output, shape index: {}]
  %s4 = sld [smem:[#allocation0]]
  $region30: #{tpu_custom_call.1} parent=0
    _
  %s6 = ssub.s32 1, %s4
  %s7 = scalar_select 0, %s6, %s4
  $region1: #{tpu_custom_call.1} parent=0
    #allocation2 [shape = 'u8[8192]{0}', space=vmem, size = 0x2000, scoped, tag = 'input window, operand 0, single buffered']
    #allocation3 [shape = 's32[1]{0}', space=sflag, size = 0x4, scoped, tag = 'scoped memory for tpu_custom_call.1']
    #allocation4 [shape = 's32[1]{0}', space=sflag, size = 0x4, scoped, tag = 'scoped memory for tpu_custom_call.1']
    #allocation5 [shape = 'u8[16384]{0}', space=vmem, size = 0x4000, scoped, tag = 'input window, operand 1, single buffered']
    #allocation6 [shape = 's32[1]{0}', space=sflag, size = 0x4, scoped, tag = 'scoped memory for tpu_custom_call.1']
    #allocation7 [shape = 'u8[8192]{0}', space=vmem, size = 0x2000, scoped, tag = 'output window, operand 0, single buffered']
    %8 = vsyncpa [#allocation3], 0
    %9 = vsyncpa [#allocation6], 0
    %10 = vsyncpa [#allocation4], 0
    // Predicated region
    $region2: #{tpu_custom_call.1} parent=1 // pred_check
      _
    $region3: #{tpu_custom_call.1} parent=1 // pred_check_branch
      %12 = sbr.rel (0) target = $region5
    $region4: #{tpu_custom_call.1} parent=1 // pred_region
      %14 = vsyncadd [#allocation3], 0
      %s15 = sshll.u32 %s0, 4
      %s16 = int_to_ptr.hbm [resolvable:$true] %s15
      %s17 = sshll.u32 [#allocation2], 4
      %s18 = int_to_ptr.vmem [resolvable:$true] %s17
      %23 = dma.hbm_to_vmem [thread:$0]  %s16, 256, %s18, [#allocation3], 128, 128, 8
    $region5: #{tpu_custom_call.1} parent=1 // pred_fallthru
      _
    // Predicated region
    $region6: #{tpu_custom_call.1} parent=1 // pred_check
      _
    $region7: #{tpu_custom_call.1} parent=1 // pred_check_branch
      %25 = sbr.rel (0) target = $region9
    $region8: #{tpu_custom_call.1} parent=1 // pred_region
      %27 = vsyncadd [#allocation6], 0
      %s28 = sshll.u32 %s1, 4
      %s29 = int_to_ptr.hbm [resolvable:$true] %s28
      %s30 = sshll.u32 [#allocation5], 4
      %s31 = int_to_ptr.vmem [resolvable:$true] %s30
      %36 = dma.hbm_to_vmem [thread:$0]  %s29, 512, %s31, [#allocation6], 128, 128, 8
    $region9: #{tpu_custom_call.1} parent=1 // pred_fallthru
      _
    // Predicated region
    $region10: #{tpu_custom_call.1} parent=1 // pred_check
      _
    $region11: #{tpu_custom_call.1} parent=1 // pred_check_branch
      %38 = sbr.rel (0) target = $region13
    $region12: #{tpu_custom_call.1} parent=1 // pred_region
      _
    $region13: #{tpu_custom_call.1} parent=1 // pred_fallthru
      _
    // Predicated region
    $region14: #{tpu_custom_call.1} parent=1 // pred_check
      _
    $region15: #{tpu_custom_call.1} parent=1 // pred_check_branch
      %40 = sbr.rel (0) target = $region17
    $region16: #{tpu_custom_call.1} parent=1 // pred_region
      %42 = dma.done [#allocation3], 256
    $region17: #{tpu_custom_call.1} parent=1 // pred_fallthru
      _
    // Predicated region
    $region18: #{tpu_custom_call.1} parent=1 // pred_check
      _
    $region19: #{tpu_custom_call.1} parent=1 // pred_check_branch
      %44 = sbr.rel (0) target = $region21
    $region20: #{tpu_custom_call.1} parent=1 // pred_region
      %46 = dma.done [#allocation6], 512
    $region21: #{tpu_custom_call.1} parent=1 // pred_fallthru
      _
    %v47 = vld [vmem:[#allocation2] sm:$0xff]
    %v48 = vld [vmem:[#allocation2 + $0x8] sm:$0xff]
    %v49 = vld [vmem:[#allocation5] sm:$0xff]
    %v50 = vld [vmem:[#allocation5 + $0x8] sm:$0xff]
    %v51 = vld [vmem:[#allocation5 + $0x10] sm:$0xff]
    %v52 = vld [vmem:[#allocation5 + $0x18] sm:$0xff]
    %v53 = vld [vmem:[%s2] sm:$0x1]
    %v55 = vperm.slane %v53, 0
    %vm57 = vcmask 261120
    %v59 = vsel %vm57, %v47, 0
    %v62 = vsel %vm57, %v48, 0
    %64 = vmatpush.msra.mxu0 0.0
    %65 = vmatpush.msra.mxu0 0.0
    %66 = vmatpush.msra.mxu0 0.0
    %67 = vmatpush.msra.mxu0 0.0
    %68 = vmatpush.msra.mxu0 0.0
    %69 = vmatpush.msra.mxu0 0.0
    %70 = vmatpush.msra.mxu0 0.0
    %71 = vmatpush.msra.mxu0 0.0
    %72 = vmatpush.msra.mxu0 0.0
    %73 = vmatpush.msra.mxu0 0.0
    %74 = vmatpush.msra.mxu0 0.0
    %75 = vmatpush.msra.mxu0 0.0
    %76 = vmatpush.msra.mxu0 %v52
    %77 = vmatpush.msra.mxu0 %v51
    %78 = vmatpush.msra.mxu0 %v50
    %79 = vmatpush.msra.mxu0 %v49
    %80 = vmatmul.f32.gmra.mxu0 %v59
    %v81 = vpop.f32.mrf.mxu0
    %v82 = vadd.f32 %v55, %v81
    %83 = vmatmul.f32.gmra.mxu0 %v62
    %v84 = vpop.f32.mrf.mxu0
    %v85 = vadd.f32 %v55, %v84
    %86 = vdwg.mxu0
    %87 = vst [vmem:[#allocation7] sm:$0xff] %v82
    %88 = vst [vmem:[#allocation7 + $0x8] sm:$0xff] %v85
    // Predicated region
    $region22: #{tpu_custom_call.1} parent=1 // pred_check
      _
    $region23: #{tpu_custom_call.1} parent=1 // pred_check_branch
      %90 = sbr.rel (0) target = $region25
    $region24: #{tpu_custom_call.1} parent=1 // pred_region
      %92 = vsyncadd [#allocation4], 0
      %s93 = sshll.u32 [#allocation7], 4
      %s94 = int_to_ptr.vmem [resolvable:$true] %s93
      %s95 = sshll.u32 %s3, 4
      %s96 = int_to_ptr.hbm [resolvable:$true] %s95
      %101 = dma.vmem_to_hbm [thread:$0]  %s94, 256, %s96, [#allocation4], 128, 128, 8
    $region25: #{tpu_custom_call.1} parent=1 // pred_fallthru
      _
    // Predicated region
    $region26: #{tpu_custom_call.1} parent=1 // pred_check
      _
    $region27: #{tpu_custom_call.1} parent=1 // pred_check_branch
      %103 = sbr.rel (0) target = $region29
    $region28: #{tpu_custom_call.1} parent=1 // pred_region
      %105 = dma.done [#allocation4], 256
    $region29: #{tpu_custom_call.1} parent=1 // pred_fallthru
      _
    %106 = vsyncpa [#allocation3], 1
    %107 = vsyncpa [#allocation6], 1
    %108 = vsyncpa [#allocation4], 1

</llo_original>
